<compile_context>
chip_gen: v6e
topology: v6e:2x2x1
jax: 0.10.0
libtpu: 0.0.40
codegen_flags: <defaults>
</compile_context>

<pallas_src>
import math

import jax
import jax.numpy as jnp
from jax.experimental import pallas as pl
from jax.experimental.pallas import tpu as pltpu


def _flow_ensemble_fused_kernel(x_ref,     # VMEM (TILE_N, D)
                                wf_ref,    # VMEM (D, ED_pad)   fused per-flow weights
                                b_ref,     # VMEM (1, ED_pad)   fused per-flow biases
                                s_ref,     # VMEM (ED_pad, E)   block-indicator matrix
                                c_ref,     # VMEM (1, E)        logdet - D/2*log(2pi) + log(1/E)
                                out_ref):  # VMEM (TILE_N, 1)   mixture log-prob
    # One wide MXU matmul covers every ensemble's affine transform.
    z = jnp.dot(x_ref[...], wf_ref[...],
                preferred_element_type=jnp.float32) + b_ref[...]      # (TILE_N, ED_pad)
    sq = z * z
    # Per-ensemble squared norms via indicator matmul (stays on the MXU).
    norms = jnp.dot(sq, s_ref[...],
                    preferred_element_type=jnp.float32)               # (TILE_N, E)
    lp = -0.5 * norms + c_ref[...]                                     # (TILE_N, E)
    # Mixture logsumexp over the (small) ensemble lane axis, once per tile.
    m = jnp.max(lp, axis=-1, keepdims=True)
    out_ref[...] = m + jnp.log(jnp.sum(jnp.exp(lp - m), axis=-1, keepdims=True))


def flow_ensembles_log_prob(x, W, b, logdet, *, tile_n=256):
    """Pallas implementation of FlowEnsembles.forward (== _log_prob).

    x:      (N, D) or (D,) float32
    W:      (E, D, D) float32   per-flow affine weight (z_i = x @ W[i] + b[i])
    b:      (E, 1, D) float32   per-flow affine bias
    logdet: (E,)      float32   log|det W_i|
    returns (N,) float32 mixture log-prob
    """
    if x.ndim == 1:                       # torch: x.unsqueeze(0)
        x = x[None, :]
    x = x.astype(jnp.float32)
    N, D = x.shape
    E = W.shape[0]
    ED = E * D

    # ---- host-side repacking (pure layout work, done once per call) ----
    # Fused weight slab: Wf[d, i*D + f] = W[i, d, f]  -> z_fused[:, i*D:(i+1)*D] = z_i
    Wf = jnp.transpose(W.astype(jnp.float32), (1, 0, 2)).reshape(D, ED)
    bf = b.astype(jnp.float32).reshape(1, ED)

    # Pad the fused output columns up to a lane-width multiple (>=128) so the
    # MXU / vector stores see dense lanes.  Padded columns are all-zero and the
    # indicator matrix zeros them out of the norms.
    ED_pad = max(128, pl.cdiv(ED, 128) * 128)
    Wf = jnp.pad(Wf, ((0, 0), (0, ED_pad - ED)))
    bf = jnp.pad(bf, ((0, 0), (0, ED_pad - ED)))

    # Block-indicator matrix S[i*D+f, i] = 1 (zero on padded rows).
    col_ens = jnp.arange(ED_pad) // D
    valid = jnp.arange(ED_pad) < ED
    S = ((col_ens[:, None] == jnp.arange(E)[None, :]) & valid[:, None]).astype(jnp.float32)

    # Per-ensemble scalar terms folded into one lane-dense row.
    const = (logdet.astype(jnp.float32)
             - 0.5 * D * math.log(2.0 * math.pi)
             + math.log(1.0 / E)).reshape(1, E)

    # ---- N tiling (parallel grid axis), rows padded with zeros ----
    tile_n = max(8, (tile_n // 8) * 8)
    n_round8 = pl.cdiv(N, 8) * 8
    TILE_N = min(tile_n, n_round8)
    N_pad = pl.cdiv(N, TILE_N) * TILE_N
    x_pad = jnp.pad(x, ((0, N_pad - N), (0, 0)))

    out = pl.pallas_call(
        _flow_ensemble_fused_kernel,
        out_shape=jax.ShapeDtypeStruct((N_pad, 1), jnp.float32),
        grid_spec=pltpu.PrefetchScalarGridSpec(
            num_scalar_prefetch=0,
            grid=(N_pad // TILE_N,),
            in_specs=[
                pl.BlockSpec((TILE_N, D), lambda i: (i, 0)),      # x tile
                pl.BlockSpec((D, ED_pad), lambda i: (0, 0)),      # fused W
                pl.BlockSpec((1, ED_pad), lambda i: (0, 0)),      # fused b
                pl.BlockSpec((ED_pad, E), lambda i: (0, 0)),      # indicator S
                pl.BlockSpec((1, E), lambda i: (0, 0)),           # const row
            ],
            out_specs=pl.BlockSpec((TILE_N, 1), lambda i: (i, 0)),
        ),
        compiler_params=pltpu.CompilerParams(
            dimension_semantics=("parallel",)),   # N tiles are independent
    )(x_pad, Wf, bf, S, const)
    return out[:N, 0]


def _reference_log_prob(x, W, b, logdet):
    if x.ndim == 1:
        x = x[None, :]
    N, D = x.shape
    E = W.shape[0]
    z = jnp.einsum("nd,edf->enf", x, W) + b                               # (E, N, D)
    base_lp = -0.5 * jnp.sum(z * z, axis=-1) - 0.5 * D * math.log(2.0 * math.pi)
    act_vec = base_lp + logdet[:, None]                                   # (E, N)
    return jax.scipy.special.logsumexp(jnp.log(1.0 / E) + act_vec, axis=0)


if __name__ == "__main__":
    key = jax.random.PRNGKey(0)
    N, D, E = 16, 4, 3                      # small: 16 points, 4-dim target, 3 flows

    kx, kw, kb = jax.random.split(key, 3)
    x = jax.random.normal(kx, (N, D), dtype=jnp.float32)

    # deterministic invertible affine weights: identity + small perturbation
    W = (jnp.eye(D, dtype=jnp.float32)[None, :, :]
         + 0.1 * jax.random.normal(kw, (E, D, D), dtype=jnp.float32))
    b = 0.1 * jax.random.normal(kb, (E, 1, D), dtype=jnp.float32)
    _, logdet = jnp.linalg.slogdet(W)       # parameter-setup glue in plain JAX
    logdet = logdet.astype(jnp.float32)

    out = flow_ensembles_log_prob(x, W, b, logdet)
    out = jax.block_until_ready(out)

    ref = _reference_log_prob(x, W, b, logdet)
    assert out.shape == (N,)
    assert jnp.allclose(out, ref, atol=1e-4, rtol=1e-4), (out, ref)

    # TODO(synk): Flow/CompositeTransform internals are external to this module;
    # a single affine transform + standard-normal base stands in for them.
    print("KERNEL_OK")
</pallas_src>

<mosaic_0001>
module attributes {stable_mosaic.version = 11 : i64} {
  func.func @_flow_ensemble_fused_kernel(%arg0: i32, %arg1: memref<16x4xf32, #tpu.memory_space<vmem>>, %arg2: memref<4x128xf32, #tpu.memory_space<vmem>>, %arg3: memref<1x128xf32, #tpu.memory_space<vmem>>, %arg4: memref<128x3xf32, #tpu.memory_space<vmem>>, %arg5: memref<1x3xf32, #tpu.memory_space<vmem>>, %arg6: memref<16x1xf32, #tpu.memory_space<vmem>>) attributes {dimension_semantics = [#tpu.dimension_semantics<parallel>], iteration_bounds = array<i64: 1>, scalar_prefetch = 0 : i64, scratch_operands = 0 : i64, tpu.core_type = #tpu.core_type<tc>, window_params = [{transform_indices = @transform_0, window_bounds = array<i64: 16, 4>}, {pipeline_mode = #tpu.pipeline_mode<synchronous>, transform_indices = @transform_1, window_bounds = array<i64: 4, 128>}, {pipeline_mode = #tpu.pipeline_mode<synchronous>, transform_indices = @transform_2, window_bounds = array<i64: 1, 128>}, {pipeline_mode = #tpu.pipeline_mode<synchronous>, transform_indices = @transform_3, window_bounds = array<i64: 128, 3>}, {pipeline_mode = #tpu.pipeline_mode<synchronous>, transform_indices = @transform_4, window_bounds = array<i64: 1, 3>}, {transform_indices = @transform_5, window_bounds = array<i64: 16, 1>}]} {
    %c0 = arith.constant 0 : index
    %c0_0 = arith.constant 0 : index
    %0 = vector.load %arg1[%c0, %c0_0] : memref<16x4xf32, #tpu.memory_space<vmem>>, vector<16x4xf32>
    %c0_1 = arith.constant 0 : index
    %c0_2 = arith.constant 0 : index
    %1 = vector.load %arg2[%c0_1, %c0_2] : memref<4x128xf32, #tpu.memory_space<vmem>>, vector<4x128xf32>
    %cst = arith.constant dense<0.000000e+00> : vector<16x128xf32>
    %2 = tpu.matmul %0, %1, %cst {dimension_numbers = #tpu.dot_dimension_numbers<[1], [0], [0], [1], [0, 0, 1, 1], [], []>} : vector<16x4xf32>, vector<4x128xf32>, vector<16x128xf32> -> vector<16x128xf32>
    %c0_3 = arith.constant 0 : index
    %c0_4 = arith.constant 0 : index
    %3 = vector.load %arg3[%c0_3, %c0_4] : memref<1x128xf32, #tpu.memory_space<vmem>>, vector<1x128xf32>
    %4 = vector.broadcast %3 : vector<1x128xf32> to vector<16x128xf32>
    %5 = arith.addf %2, %4 : vector<16x128xf32>
    %6 = arith.mulf %5, %5 : vector<16x128xf32>
    %c0_5 = arith.constant 0 : index
    %c0_6 = arith.constant 0 : index
    %7 = vector.load %arg4[%c0_5, %c0_6] : memref<128x3xf32, #tpu.memory_space<vmem>>, vector<128x3xf32>
    %cst_7 = arith.constant dense<0.000000e+00> : vector<16x3xf32>
    %8 = tpu.matmul %6, %7, %cst_7 {dimension_numbers = #tpu.dot_dimension_numbers<[1], [0], [0], [1], [0, 0, 1, 1], [], []>} : vector<16x128xf32>, vector<128x3xf32>, vector<16x3xf32> -> vector<16x3xf32>
    %cst_8 = arith.constant -5.000000e-01 : f32
    %9 = vector.broadcast %cst_8 : f32 to vector<16x3xf32>
    %10 = arith.mulf %9, %8 : vector<16x3xf32>
    %c0_9 = arith.constant 0 : index
    %c0_10 = arith.constant 0 : index
    %11 = vector.load %arg5[%c0_9, %c0_10] : memref<1x3xf32, #tpu.memory_space<vmem>>, vector<1x3xf32>
    %12 = vector.broadcast %11 : vector<1x3xf32> to vector<16x3xf32>
    %13 = arith.addf %10, %12 : vector<16x3xf32>
    %cst_11 = arith.constant dense<0xFF800000> : vector<16xf32>
    %14 = vector.multi_reduction <maximumf>, %13, %cst_11 [1] : vector<16x3xf32> to vector<16xf32>
    %15 = vector.shape_cast %14 : vector<16xf32> to vector<16x1xf32>
    %16 = vector.broadcast %15 : vector<16x1xf32> to vector<16x3xf32>
    %17 = arith.subf %13, %16 : vector<16x3xf32>
    %18 = math.exp %17 : vector<16x3xf32>
    %cst_12 = arith.constant dense<0.000000e+00> : vector<16xf32>
    %19 = vector.multi_reduction <add>, %18, %cst_12 [1] : vector<16x3xf32> to vector<16xf32>
    %20 = vector.shape_cast %19 : vector<16xf32> to vector<16x1xf32>
    %21 = math.log %20 : vector<16x1xf32>
    %22 = arith.addf %15, %21 : vector<16x1xf32>
    %c0_13 = arith.constant 0 : index
    %c0_14 = arith.constant 0 : index
    %23 = vector.load %arg6[%c0_13, %c0_14] : memref<16x1xf32, #tpu.memory_space<vmem>>, vector<16x1xf32>
    tpu.vector_store %arg6[%c0_13, %c0_14], %22 {strides = array<i32>} : memref<16x1xf32, #tpu.memory_space<vmem>>, vector<16x1xf32>,
    return
  }
  func.func @transform_0(%arg0: i32) -> (i32, i32) {
    %c0_i32 = arith.constant 0 : i32
    %c0_i32_0 = arith.constant 0 : i32
    return %arg0, %c0_i32 : i32, i32
  }
  func.func @transform_1(%arg0: i32) -> (i32, i32) {
    %c0_i32 = arith.constant 0 : i32
    %c0_i32_0 = arith.constant 0 : i32
    %c0_i32_1 = arith.constant 0 : i32
    return %c0_i32, %c0_i32_0 : i32, i32
  }
  func.func @transform_2(%arg0: i32) -> (i32, i32) {
    %c0_i32 = arith.constant 0 : i32
    %c0_i32_0 = arith.constant 0 : i32
    %c0_i32_1 = arith.constant 0 : i32
    return %c0_i32, %c0_i32_0 : i32, i32
  }
  func.func @transform_3(%arg0: i32) -> (i32, i32) {
    %c0_i32 = arith.constant 0 : i32
    %c0_i32_0 = arith.constant 0 : i32
    %c0_i32_1 = arith.constant 0 : i32
    return %c0_i32, %c0_i32_0 : i32, i32
  }
  func.func @transform_4(%arg0: i32) -> (i32, i32) {
    %c0_i32 = arith.constant 0 : i32
    %c0_i32_0 = arith.constant 0 : i32
    %c0_i32_1 = arith.constant 0 : i32
    return %c0_i32, %c0_i32_0 : i32, i32
  }
  func.func @transform_5(%arg0: i32) -> (i32, i32) {
    %c0_i32 = arith.constant 0 : i32
    %c0_i32_0 = arith.constant 0 : i32
    return %arg0, %c0_i32 : i32, i32
  }
}

</mosaic_0001>

<llo_original>
// kernel: tpu_custom_call.1
$region0: #{tpu_custom_call.1}
  #allocation0 [shape = 'u32[]', space=smem, size = 0x4, offset = 0x4, fixed_abs, tag = 'smem constant byte address 0x4 - core index']
  #allocation1 [shape = 'u32[144,128]{1,0:T(1,128)}', space=vmem, size = 0x12000, scoped, tag = 'internal scratch']
  %s0 = inlined_call_operand.vmem [shape: f32[16,4], index: 0, kind: input, shape index: {}]
  %s1 = inlined_call_operand.vmem [shape: f32[4,128], index: 1, kind: input, shape index: {}]
  %s2 = inlined_call_operand.vmem [shape: f32[1,128], index: 2, kind: input, shape index: {}]
  %s3 = inlined_call_operand.vmem [shape: f32[128,3], index: 3, kind: input, shape index: {}]
  %s4 = inlined_call_operand.vmem [shape: f32[1,3], index: 4, kind: input, shape index: {}]
  %s5 = inlined_call_operand.vmem [shape: f32[16,1], index: 5, kind: output, shape index: {}]
  %s6 = sld [smem:[#allocation0]]
  $region30: #{tpu_custom_call.1} parent=0
    _
  %s8 = ssub.s32 1, %s6
  %s9 = scalar_select 0, %s8, %s6
  // Predicated region
  $region2: #{tpu_custom_call.1} parent=0 // pred_check
    _
  $region3: #{tpu_custom_call.1} parent=0 // pred_check_branch
    %11 = sbr.rel (0) target = $region5
  $region4: #{tpu_custom_call.1} parent=0 // pred_region
    _
  $region5: #{tpu_custom_call.1} parent=0 // pred_fallthru
    _
  // Predicated region
  $region6: #{tpu_custom_call.1} parent=0 // pred_check
    _
  $region7: #{tpu_custom_call.1} parent=0 // pred_check_branch
    %13 = sbr.rel (0) target = $region9
  $region8: #{tpu_custom_call.1} parent=0 // pred_region
    _
  $region9: #{tpu_custom_call.1} parent=0 // pred_fallthru
    _
  // Predicated region
  $region10: #{tpu_custom_call.1} parent=0 // pred_check
    _
  $region11: #{tpu_custom_call.1} parent=0 // pred_check_branch
    %15 = sbr.rel (0) target = $region13
  $region12: #{tpu_custom_call.1} parent=0 // pred_region
    _
  $region13: #{tpu_custom_call.1} parent=0 // pred_fallthru
    _
  // Predicated region
  $region14: #{tpu_custom_call.1} parent=0 // pred_check
    _
  $region15: #{tpu_custom_call.1} parent=0 // pred_check_branch
    %17 = sbr.rel (0) target = $region17
  $region16: #{tpu_custom_call.1} parent=0 // pred_region
    _
  $region17: #{tpu_custom_call.1} parent=0 // pred_fallthru
    _
  // Predicated region
  $region18: #{tpu_custom_call.1} parent=0 // pred_check
    _
  $region19: #{tpu_custom_call.1} parent=0 // pred_check_branch
    %19 = sbr.rel (0) target = $region21
  $region20: #{tpu_custom_call.1} parent=0 // pred_region
    _
  $region21: #{tpu_custom_call.1} parent=0 // pred_fallthru
    _
  %v20 = vld [vmem:[%s0] sm:$0xff]
  %v21 = vld [vmem:[%s0 + $0x8] sm:$0xff]
  %v22 = vld [vmem:[%s1] sm:$0xf]
  %v23 = vld [vmem:[%s2] sm:$0x1]
  %v25 = vlaneseq
  %v26 = vshrl.u32 %v25, 7
  %v27 = vsub.s32 0, %v26
  %v28 = vrot.slane %v23, %v27
  %vm30 = vcmask 31744
  %v32 = vsel %vm30, %v20, 0
  %v35 = vsel %vm30, %v21, 0
  %vm37 = vcmask 1043456
  %v39 = vsel %vm37, %v22, 0
  %41 = vmatprep.subr.mxu0 0.0
  %42 = vmatpush1.msra.mxu0 0.0
  %43 = vmatprep.subr.mxu0 0.0
  %44 = vmatpush1.msra.mxu0 0.0
  %45 = vmatprep.subr.mxu0 0.0
  %46 = vmatpush1.msra.mxu0 0.0
  %47 = vmatprep.subr.mxu0 0.0
  %48 = vmatpush1.msra.mxu0 0.0
  %49 = vmatprep.subr.mxu0 0.0
  %50 = vmatpush1.msra.mxu0 0.0
  %51 = vmatprep.subr.mxu0 0.0
  %52 = vmatpush1.msra.mxu0 0.0
  %53 = vmatprep.subr.mxu0 0.0
  %54 = vmatpush1.msra.mxu0 0.0
  %55 = vmatprep.subr.mxu0 0.0
  %56 = vmatpush1.msra.mxu0 0.0
  %57 = vmatprep.subr.mxu0 0.0
  %58 = vmatpush1.msra.mxu0 0.0
  %59 = vmatprep.subr.mxu0 0.0
  %60 = vmatpush1.msra.mxu0 0.0
  %61 = vmatprep.subr.mxu0 0.0
  %62 = vmatpush1.msra.mxu0 0.0
  %63 = vmatprep.subr.mxu0 0.0
  %64 = vmatpush1.msra.mxu0 0.0
  %65 = vmatprep.subr.mxu0 0.0
  %66 = vmatpush1.msra.mxu0 0.0
  %67 = vmatprep.subr.mxu0 0.0
  %68 = vmatpush1.msra.mxu0 0.0
  %69 = vmatprep.subr.mxu0 0.0
  %70 = vmatpush1.msra.mxu0 0.0
  %71 = vmatprep.subr.mxu0 0.0
  %72 = vmatpush1.msra.mxu0 %v39
  %73 = vmatprep.subr.mxu0 0.0
  %74 = vmatpush2.msra.mxu0 0.0
  %75 = vmatprep.subr.mxu0 0.0
  %76 = vmatpush2.msra.mxu0 0.0
  %77 = vmatprep.subr.mxu0 0.0
  %78 = vmatpush2.msra.mxu0 0.0
  %79 = vmatprep.subr.mxu0 0.0
  %80 = vmatpush2.msra.mxu0 0.0
  %81 = vmatprep.subr.mxu0 0.0
  %82 = vmatpush2.msra.mxu0 0.0
  %83 = vmatprep.subr.mxu0 0.0
  %84 = vmatpush2.msra.mxu0 0.0
  %85 = vmatprep.subr.mxu0 0.0
  %86 = vmatpush2.msra.mxu0 0.0
  %87 = vmatprep.subr.mxu0 0.0
  %88 = vmatpush2.msra.mxu0 0.0
  %89 = vmatprep.subr.mxu0 0.0
  %90 = vmatpush2.msra.mxu0 0.0
  %91 = vmatprep.subr.mxu0 0.0
  %92 = vmatpush2.msra.mxu0 0.0
  %93 = vmatprep.subr.mxu0 0.0
  %94 = vmatpush2.msra.mxu0 0.0
  %95 = vmatprep.subr.mxu0 0.0
  %96 = vmatpush2.msra.mxu0 0.0
  %97 = vmatprep.subr.mxu0 0.0
  %98 = vmatpush2.msra.mxu0 0.0
  %99 = vmatprep.subr.mxu0 0.0
  %100 = vmatpush2.msra.mxu0 0.0
  %101 = vmatprep.subr.mxu0 0.0
  %102 = vmatpush2.msra.mxu0 0.0
  %103 = vmatprep.subr.mxu0 0.0
  %104 = vmatpush2.msra.mxu0 0.0
  %105 = vmatprep.mubr.f32.mxu0 0.0
  %106 = vmatmul.mubr.f32.gmra.mxu0 %v32
  %v107 = vpop.f32.mrf.mxu0
  %v108 = vadd.f32 %v28, %v107
  %v109 = vpop.f32.mrf.mxu0
  %110 = vmatprep.mubr.f32.mxu0 0.0
  %111 = vmatmul.mubr.f32.gmra.mxu0 %v35
  %v112 = vpop.f32.mrf.mxu0
  %v113 = vadd.f32 %v28, %v112
  %v114 = vpop.f32.mrf.mxu0
  %115 = vdwg.mxu0
  %v116 = vmul.f32 %v108, %v108
  %v117 = vmul.f32 %v113, %v113
  %v118 = vld [vmem:[%s3] sm:$0xff]
  %v119 = vld [vmem:[%s3 + $0x8] sm:$0xff]
  %v120 = vld [vmem:[%s3 + $0x10] sm:$0xff]
  %v121 = vld [vmem:[%s3 + $0x18] sm:$0xff]
  %v122 = vld [vmem:[%s3 + $0x20] sm:$0xff]
  %v123 = vld [vmem:[%s3 + $0x28] sm:$0xff]
  %v124 = vld [vmem:[%s3 + $0x30] sm:$0xff]
  %v125 = vld [vmem:[%s3 + $0x38] sm:$0xff]
  %v126 = vld [vmem:[%s3 + $0x40] sm:$0xff]
  %v127 = vld [vmem:[%s3 + $0x48] sm:$0xff]
  %v128 = vld [vmem:[%s3 + $0x50] sm:$0xff]
  %v129 = vld [vmem:[%s3 + $0x58] sm:$0xff]
  %v130 = vld [vmem:[%s3 + $0x60] sm:$0xff]
  %v131 = vld [vmem:[%s3 + $0x68] sm:$0xff]
  %v132 = vld [vmem:[%s3 + $0x70] sm:$0xff]
  %v133 = vld [vmem:[%s3 + $0x78] sm:$0xff]
  %134 = vmatprep.subr.mxu0 0.0
  %135 = vmatpush1.msra.mxu0 %v133
  %136 = vmatprep.subr.mxu0 0.0
  %137 = vmatpush1.msra.mxu0 %v132
  %138 = vmatprep.subr.mxu0 0.0
  %139 = vmatpush1.msra.mxu0 %v131
  %140 = vmatprep.subr.mxu0 0.0
  %141 = vmatpush1.msra.mxu0 %v130
  %142 = vmatprep.subr.mxu0 0.0
  %143 = vmatpush1.msra.mxu0 %v129
  %144 = vmatprep.subr.mxu0 0.0
  %145 = vmatpush1.msra.mxu0 %v128
  %146 = vmatprep.subr.mxu0 0.0
  %147 = vmatpush1.msra.mxu0 %v127
  %148 = vmatprep.subr.mxu0 0.0
  %149 = vmatpush1.msra.mxu0 %v126
  %150 = vmatprep.subr.mxu0 0.0
  %151 = vmatpush1.msra.mxu0 %v125
  %152 = vmatprep.subr.mxu0 0.0
  %153 = vmatpush1.msra.mxu0 %v124
  %154 = vmatprep.subr.mxu0 0.0
  %155 = vmatpush1.msra.mxu0 %v123
  %156 = vmatprep.subr.mxu0 0.0
  %157 = vmatpush1.msra.mxu0 %v122
  %158 = vmatprep.subr.mxu0 0.0
  %159 = vmatpush1.msra.mxu0 %v121
  %160 = vmatprep.subr.mxu0 0.0
  %161 = vmatpush1.msra.mxu0 %v120
  %162 = vmatprep.subr.mxu0 0.0
  %163 = vmatpush1.msra.mxu0 %v119
  %164 = vmatprep.subr.mxu0 0.0
  %165 = vmatpush1.msra.mxu0 %v118
  %166 = vmatprep.subr.mxu0 0.0
  %167 = vmatpush2.msra.mxu0 0.0
  %168 = vmatprep.subr.mxu0 0.0
  %169 = vmatpush2.msra.mxu0 0.0
  %170 = vmatprep.subr.mxu0 0.0
  %171 = vmatpush2.msra.mxu0 0.0
  %172 = vmatprep.subr.mxu0 0.0
  %173 = vmatpush2.msra.mxu0 0.0
  %174 = vmatprep.subr.mxu0 0.0
  %175 = vmatpush2.msra.mxu0 0.0
  %176 = vmatprep.subr.mxu0 0.0
  %177 = vmatpush2.msra.mxu0 0.0
  %178 = vmatprep.subr.mxu0 0.0
  %179 = vmatpush2.msra.mxu0 0.0
  %180 = vmatprep.subr.mxu0 0.0
  %181 = vmatpush2.msra.mxu0 0.0
  %182 = vmatprep.subr.mxu0 0.0
  %183 = vmatpush2.msra.mxu0 0.0
  %184 = vmatprep.subr.mxu0 0.0
  %185 = vmatpush2.msra.mxu0 0.0
  %186 = vmatprep.subr.mxu0 0.0
  %187 = vmatpush2.msra.mxu0 0.0
  %188 = vmatprep.subr.mxu0 0.0
  %189 = vmatpush2.msra.mxu0 0.0
  %190 = vmatprep.subr.mxu0 0.0
  %191 = vmatpush2.msra.mxu0 0.0
  %192 = vmatprep.subr.mxu0 0.0
  %193 = vmatpush2.msra.mxu0 0.0
  %194 = vmatprep.subr.mxu0 0.0
  %195 = vmatpush2.msra.mxu0 0.0
  %196 = vmatprep.subr.mxu0 0.0
  %197 = vmatpush2.msra.mxu0 0.0
  %198 = vmatprep.mubr.f32.mxu0 0.0
  %199 = vmatmul.mubr.f32.gmra.mxu0 %v116
  %v200 = vpop.f32.mrf.mxu0
  %v201 = vadd.f32 0.0, %v200
  %v202 = vpop.f32.mrf.mxu0
  %203 = vmatprep.mubr.f32.mxu0 0.0
  %204 = vmatmul.mubr.f32.gmra.mxu0 %v117
  %v205 = vpop.f32.mrf.mxu0
  %v206 = vadd.f32 0.0, %v205
  %v207 = vpop.f32.mrf.mxu0
  %208 = vdwg.mxu0
  %v209 = vmul.f32 %v201, -0.5
  %v210 = vmul.f32 %v206, -0.5
  %v211 = vld [vmem:[%s4] sm:$0x1]
  %v213 = vlaneseq
  %v214 = vshrl.u32 %v213, 7
  %v215 = vsub.s32 0, %v214
  %v216 = vrot.slane %v211, %v215
  %v218 = vadd.f32 %v209, %v216
  %v219 = vadd.f32 %v210, %v216
  %vm220 = vcmask 23552
  %v221 = vsel %vm220, %v218, -inf
  %222 = vmax.xlane.f32.xlu0 %v221
  %v223 = vpop.xlane.xlu0 %222
  %v224 = vsel %vm220, %v219, -inf
  %225 = vmax.xlane.f32.xlu0 %v224
  %v226 = vpop.xlane.xlu0 %225
  %v227 = vsub.f32 %v218, %v223
  %v228 = vsub.f32 %v219, %v226
  %v229 = vmul.f32 %v227, 1.442695
  %v230 = vpow.pop %v229
  %v231 = vmul.f32 %v228, 1.442695
  %v232 = vpow.pop %v231
  %v233 = vsel %vm220, %v230, 0.0
  %234 = vadd.xlane.f32.xlu0 %v233
  %v235 = vpop.xlane.xlu0 %234
  %v236 = vsel %vm220, %v232, 0.0
  %237 = vadd.xlane.f32.xlu0 %v236
  %v238 = vpop.xlane.xlu0 %237
  %v239 = vlog2.pop %v235
  %v240 = vmul.f32 %v239, 0.6931472
  %v241 = vlog2.pop %v238
  %v242 = vmul.f32 %v241, 0.6931472
  %v243 = vadd.f32 %v223, %v240
  %v244 = vadd.f32 %v226, %v242
  %vm245 = vcmask 7168
  %246 = vst.msk [vmem:[%s5] sm:$0xff] %vm245, %v243
  %247 = vst.msk [vmem:[%s5 + $0x8] sm:$0xff] %vm245, %v244
  // Predicated region
  $region22: #{tpu_custom_call.1} parent=0 // pred_check
    _
  $region23: #{tpu_custom_call.1} parent=0 // pred_check_branch
    %249 = sbr.rel (0) target = $region25
  $region24: #{tpu_custom_call.1} parent=0 // pred_region
    _
  $region25: #{tpu_custom_call.1} parent=0 // pred_fallthru
    _
  // Predicated region
  $region26: #{tpu_custom_call.1} parent=0 // pred_check
    _
  $region27: #{tpu_custom_call.1} parent=0 // pred_check_branch
    %251 = sbr.rel (0) target = $region29
  $region28: #{tpu_custom_call.1} parent=0 // pred_region
    _
  $region29: #{tpu_custom_call.1} parent=0 // pred_fallthru
    _

</llo_original>
